<compile_context>
chip_gen: v5e
topology: v5e:2x2
jax: 0.10.0
libtpu: 0.0.40
codegen_flags: <defaults>
</compile_context>

<pallas_src>
import functools

import jax
import jax.numpy as jnp
from jax.experimental import pallas as pl
from jax.experimental.pallas import tpu as pltpu

IN_FEATURES = 94
HIDDEN = 32


def _round_up(x, m):
    return (x + m - 1) // m * m


# ---------------------------------------------------------------------------
# Kernel
# ---------------------------------------------------------------------------
def linear_vae_kernel(x_ref, w_in_ref, b_in_ref, w_dec_ref, b_dec_ref, eps_ref,
                      out_ref, mu_ref, logvar_ref):
    lp = mu_ref.shape[-1]                      # padded latent width (multiple of 128)
    x = x_ref[...]                             # (TB, 128)

    # Fused, encoder-folded projection: x @ [W_xmu | W_xvar] + [b_mu | b_var]
    y = jnp.dot(x, w_in_ref[...], preferred_element_type=jnp.float32) + b_in_ref[...]
    mu = y[:, :lp]                             # lane-aligned slices (128 boundary)
    logvar = y[:, lp:]

    # reparameterize: z = eps * exp(0.5 * logvar) + mu   (exp rides the EUP slot)
    std = jnp.exp(0.5 * logvar)
    z = eps_ref[...] * std + mu

    # decoder: Linear(latent, latent)
    out = jnp.dot(z, w_dec_ref[...], preferred_element_type=jnp.float32) + b_dec_ref[...]

    out_ref[...] = out
    mu_ref[...] = mu
    logvar_ref[...] = logvar


# ---------------------------------------------------------------------------
# Parameter preparation: fold encoder into mu/var, fuse mu|var, pad to 128 lanes
# ---------------------------------------------------------------------------
def prepare_packed_params(params, latent_pad):
    L = params["w_mu"].shape[1]
    dot = functools.partial(jnp.dot, precision=jax.lax.Precision.HIGHEST)

    # Fold the (purely linear) encoder into the mu / var projections.
    w_xmu = dot(params["w_enc"], params["w_mu"])                      # [94, L]
    b_xmu = dot(params["b_enc"], params["w_mu"]) + params["b_mu"]     # [1, L]
    w_xvar = dot(params["w_enc"], params["w_var"])
    b_xvar = dot(params["b_enc"], params["w_var"]) + params["b_var"]

    in_pad = _round_up(IN_FEATURES, 128)
    Lp = latent_pad
    f32 = jnp.float32

    w_in = jnp.zeros((in_pad, 2 * Lp), f32)
    w_in = w_in.at[:IN_FEATURES, :L].set(w_xmu)
    w_in = w_in.at[:IN_FEATURES, Lp:Lp + L].set(w_xvar)

    b_in = jnp.zeros((1, 2 * Lp), f32)
    b_in = b_in.at[:, :L].set(b_xmu)
    b_in = b_in.at[:, Lp:Lp + L].set(b_xvar)

    w_dec = jnp.zeros((Lp, Lp), f32).at[:L, :L].set(params["w_dec"])
    b_dec = jnp.zeros((1, Lp), f32).at[:, :L].set(params["b_dec"])

    return dict(w_in=w_in, b_in=b_in, w_dec=w_dec, b_dec=b_dec)


# ---------------------------------------------------------------------------
# Wrapper
# ---------------------------------------------------------------------------
def linear_vae_forward(x, eps, packed, latent_dim, *, max_rows_per_block=1024):
    B = x.shape[0]
    L = latent_dim
    Lp = packed["w_dec"].shape[0]
    in_pad = packed["w_in"].shape[0]

    # Batch tile: large for throughput, small (but 8-aligned) for tiny batches.
    tb = min(max_rows_per_block, _round_up(B, 8))
    b_pad = _round_up(B, tb)
    grid = (b_pad // tb,)

    # Zero-pad activations to lane-aligned shapes.
    xp = jnp.zeros((b_pad, in_pad), jnp.float32).at[:B, :IN_FEATURES].set(x)
    epsp = jnp.zeros((b_pad, Lp), jnp.float32).at[:B, :L].set(eps)

    def row_spec(width):
        return pl.BlockSpec((tb, width), lambda i: (i, 0))

    def const_spec(shape):
        return pl.BlockSpec(shape, lambda i: (0, 0))   # weights stay VMEM-resident

    out_shapes = tuple(
        jax.ShapeDtypeStruct((b_pad, Lp), jnp.float32) for _ in range(3)
    )

    out, mu, logvar = pl.pallas_call(
        linear_vae_kernel,
        out_shape=out_shapes,
        grid=grid,
        in_specs=[
            row_spec(in_pad),                 # x        (TB, 128)
            const_spec((in_pad, 2 * Lp)),     # W_in     (128, 2*Lp)
            const_spec((1, 2 * Lp)),          # b_in
            const_spec((Lp, Lp)),             # W_dec
            const_spec((1, Lp)),              # b_dec
            row_spec(Lp),                     # eps      (TB, Lp)
        ],
        out_specs=(row_spec(Lp), row_spec(Lp), row_spec(Lp)),
        compiler_params=pltpu.CompilerParams(
            dimension_semantics=("parallel",)),   # batch axis -> both TCs on v7x
    )(xp, packed["w_in"], packed["b_in"], packed["w_dec"], packed["b_dec"], epsp)

    # Strip the lane padding back off.
    return out[:B, :L], mu[:B, :L], logvar[:B, :L]


# ---------------------------------------------------------------------------
# Init + pure-JAX reference (original, unfolded semantics)
# ---------------------------------------------------------------------------
def init_linear(key, fan_in, fan_out):
    """PyTorch nn.Linear default init: U(-1/sqrt(fan_in), 1/sqrt(fan_in))."""
    kw, kb = jax.random.split(key)
    bound = 1.0 / jnp.sqrt(jnp.float32(fan_in))
    w = jax.random.uniform(kw, (fan_in, fan_out), jnp.float32, -bound, bound)
    b = jax.random.uniform(kb, (1, fan_out), jnp.float32, -bound, bound)
    return w, b


def make_params(key, latent_dim):
    k1, k2, k3, k4 = jax.random.split(key, 4)
    w_enc, b_enc = init_linear(k1, IN_FEATURES, HIDDEN)
    w_mu, b_mu = init_linear(k2, HIDDEN, latent_dim)
    w_var, b_var = init_linear(k3, HIDDEN, latent_dim)
    w_dec, b_dec = init_linear(k4, latent_dim, latent_dim)
    return dict(w_enc=w_enc, b_enc=b_enc, w_mu=w_mu, b_mu=b_mu,
                w_var=w_var, b_var=b_var, w_dec=w_dec, b_dec=b_dec)


def reference_forward(x, params, eps):
    dot = functools.partial(jnp.dot, precision=jax.lax.Precision.HIGHEST)
    h = dot(x, params["w_enc"]) + params["b_enc"]
    mu = dot(h, params["w_mu"]) + params["b_mu"]
    logvar = dot(h, params["w_var"]) + params["b_var"]
    z = eps * jnp.exp(0.5 * logvar) + mu
    out = dot(z, params["w_dec"]) + params["b_dec"]
    return out, mu, logvar


if __name__ == "__main__":
    latent_dim = 16
    batch = 8

    key = jax.random.PRNGKey(0)
    k_params, k_x, k_eps = jax.random.split(key, 3)

    params = make_params(k_params, latent_dim)
    x = jax.random.normal(k_x, (batch, IN_FEATURES), jnp.float32)
    eps = jax.random.normal(k_eps, (batch, latent_dim), jnp.float32)

    Lp = _round_up(latent_dim, 128)
    packed = prepare_packed_params(params, Lp)

    out, mu, logvar = linear_vae_forward(x, eps, packed, latent_dim)
    jax.block_until_ready((out, mu, logvar))

    ref_out, ref_mu, ref_logvar = reference_forward(x, params, eps)
    # Encoder folding changes fp32 summation order only -> rounding-level diff.
    assert out.shape == (batch, latent_dim)
    assert jnp.allclose(out, ref_out, atol=1e-4, rtol=1e-4)
    assert jnp.allclose(mu, ref_mu, atol=1e-4, rtol=1e-4)
    assert jnp.allclose(logvar, ref_logvar, atol=1e-4, rtol=1e-4)

    print("KERNEL_OK")
</pallas_src>

<mosaic_0001>
module attributes {stable_mosaic.version = 11 : i64} {
  func.func @linear_vae_kernel(%arg0: i32, %arg1: memref<8x128xf32, #tpu.memory_space<vmem>>, %arg2: memref<128x256xf32, #tpu.memory_space<vmem>>, %arg3: memref<1x256xf32, #tpu.memory_space<vmem>>, %arg4: memref<128x128xf32, #tpu.memory_space<vmem>>, %arg5: memref<1x128xf32, #tpu.memory_space<vmem>>, %arg6: memref<8x128xf32, #tpu.memory_space<vmem>>, %arg7: memref<8x128xf32, #tpu.memory_space<vmem>>, %arg8: memref<8x128xf32, #tpu.memory_space<vmem>>, %arg9: memref<8x128xf32, #tpu.memory_space<vmem>>) attributes {dimension_semantics = [#tpu.dimension_semantics<parallel>], iteration_bounds = array<i64: 1>, scalar_prefetch = 0 : i64, scratch_operands = 0 : i64, tpu.core_type = #tpu.core_type<tc>, window_params = [{transform_indices = @transform_0, window_bounds = array<i64: 8, 128>}, {pipeline_mode = #tpu.pipeline_mode<synchronous>, transform_indices = @transform_1, window_bounds = array<i64: 128, 256>}, {pipeline_mode = #tpu.pipeline_mode<synchronous>, transform_indices = @transform_2, window_bounds = array<i64: 1, 256>}, {pipeline_mode = #tpu.pipeline_mode<synchronous>, transform_indices = @transform_3, window_bounds = array<i64: 128, 128>}, {pipeline_mode = #tpu.pipeline_mode<synchronous>, transform_indices = @transform_4, window_bounds = array<i64: 1, 128>}, {transform_indices = @transform_5, window_bounds = array<i64: 8, 128>}, {transform_indices = @transform_6, window_bounds = array<i64: 8, 128>}, {transform_indices = @transform_7, window_bounds = array<i64: 8, 128>}, {transform_indices = @transform_8, window_bounds = array<i64: 8, 128>}]} {
    %c0 = arith.constant 0 : index
    %c0_0 = arith.constant 0 : index
    %0 = vector.load %arg1[%c0, %c0_0] : memref<8x128xf32, #tpu.memory_space<vmem>>, vector<8x128xf32>
    %c0_1 = arith.constant 0 : index
    %c0_2 = arith.constant 0 : index
    %1 = vector.load %arg2[%c0_1, %c0_2] : memref<128x256xf32, #tpu.memory_space<vmem>>, vector<128x256xf32>
    %cst = arith.constant dense<0.000000e+00> : vector<8x256xf32>
    %2 = tpu.matmul %0, %1, %cst {dimension_numbers = #tpu.dot_dimension_numbers<[1], [0], [0], [1], [0, 0, 1, 1], [], []>} : vector<8x128xf32>, vector<128x256xf32>, vector<8x256xf32> -> vector<8x256xf32>
    %c0_3 = arith.constant 0 : index
    %c0_4 = arith.constant 0 : index
    %3 = vector.load %arg3[%c0_3, %c0_4] : memref<1x256xf32, #tpu.memory_space<vmem>>, vector<1x256xf32>
    %4 = vector.broadcast %3 : vector<1x256xf32> to vector<8x256xf32>
    %5 = arith.addf %2, %4 : vector<8x256xf32>
    %6 = vector.extract_strided_slice %5 {offsets = [0, 0], sizes = [8, 128], strides = [1, 1]} : vector<8x256xf32> to vector<8x128xf32>
    %7 = vector.extract_strided_slice %5 {offsets = [0, 128], sizes = [8, 128], strides = [1, 1]} : vector<8x256xf32> to vector<8x128xf32>
    %cst_5 = arith.constant 5.000000e-01 : f32
    %8 = vector.broadcast %cst_5 : f32 to vector<8x128xf32>
    %9 = arith.mulf %8, %7 : vector<8x128xf32>
    %10 = math.exp %9 : vector<8x128xf32>
    %c0_6 = arith.constant 0 : index
    %c0_7 = arith.constant 0 : index
    %11 = vector.load %arg6[%c0_6, %c0_7] : memref<8x128xf32, #tpu.memory_space<vmem>>, vector<8x128xf32>
    %12 = arith.mulf %11, %10 : vector<8x128xf32>
    %13 = arith.addf %12, %6 : vector<8x128xf32>
    %c0_8 = arith.constant 0 : index
    %c0_9 = arith.constant 0 : index
    %14 = vector.load %arg4[%c0_8, %c0_9] : memref<128x128xf32, #tpu.memory_space<vmem>>, vector<128x128xf32>
    %cst_10 = arith.constant dense<0.000000e+00> : vector<8x128xf32>
    %15 = tpu.matmul %13, %14, %cst_10 {dimension_numbers = #tpu.dot_dimension_numbers<[1], [0], [0], [1], [0, 0, 1, 1], [], []>} : vector<8x128xf32>, vector<128x128xf32>, vector<8x128xf32> -> vector<8x128xf32>
    %c0_11 = arith.constant 0 : index
    %c0_12 = arith.constant 0 : index
    %16 = vector.load %arg5[%c0_11, %c0_12] : memref<1x128xf32, #tpu.memory_space<vmem>>, vector<1x128xf32>
    %17 = vector.broadcast %16 : vector<1x128xf32> to vector<8x128xf32>
    %18 = arith.addf %15, %17 : vector<8x128xf32>
    %c0_13 = arith.constant 0 : index
    %c0_14 = arith.constant 0 : index
    %19 = vector.load %arg7[%c0_13, %c0_14] : memref<8x128xf32, #tpu.memory_space<vmem>>, vector<8x128xf32>
    tpu.vector_store %arg7[%c0_13, %c0_14], %18 {strides = array<i32>} : memref<8x128xf32, #tpu.memory_space<vmem>>, vector<8x128xf32>,
    %c0_15 = arith.constant 0 : index
    %c0_16 = arith.constant 0 : index
    %20 = vector.load %arg8[%c0_15, %c0_16] : memref<8x128xf32, #tpu.memory_space<vmem>>, vector<8x128xf32>
    tpu.vector_store %arg8[%c0_15, %c0_16], %6 {strides = array<i32>} : memref<8x128xf32, #tpu.memory_space<vmem>>, vector<8x128xf32>,
    %c0_17 = arith.constant 0 : index
    %c0_18 = arith.constant 0 : index
    %21 = vector.load %arg9[%c0_17, %c0_18] : memref<8x128xf32, #tpu.memory_space<vmem>>, vector<8x128xf32>
    tpu.vector_store %arg9[%c0_17, %c0_18], %7 {strides = array<i32>} : memref<8x128xf32, #tpu.memory_space<vmem>>, vector<8x128xf32>,
    return
  }
  func.func @transform_0(%arg0: i32) -> (i32, i32) {
    %c0_i32 = arith.constant 0 : i32
    %c0_i32_0 = arith.constant 0 : i32
    return %arg0, %c0_i32 : i32, i32
  }
  func.func @transform_1(%arg0: i32) -> (i32, i32) {
    %c0_i32 = arith.constant 0 : i32
    %c0_i32_0 = arith.constant 0 : i32
    %c0_i32_1 = arith.constant 0 : i32
    return %c0_i32, %c0_i32_0 : i32, i32
  }
  func.func @transform_2(%arg0: i32) -> (i32, i32) {
    %c0_i32 = arith.constant 0 : i32
    %c0_i32_0 = arith.constant 0 : i32
    %c0_i32_1 = arith.constant 0 : i32
    return %c0_i32, %c0_i32_0 : i32, i32
  }
  func.func @transform_3(%arg0: i32) -> (i32, i32) {
    %c0_i32 = arith.constant 0 : i32
    %c0_i32_0 = arith.constant 0 : i32
    %c0_i32_1 = arith.constant 0 : i32
    return %c0_i32, %c0_i32_0 : i32, i32
  }
  func.func @transform_4(%arg0: i32) -> (i32, i32) {
    %c0_i32 = arith.constant 0 : i32
    %c0_i32_0 = arith.constant 0 : i32
    %c0_i32_1 = arith.constant 0 : i32
    return %c0_i32, %c0_i32_0 : i32, i32
  }
  func.func @transform_5(%arg0: i32) -> (i32, i32) {
    %c0_i32 = arith.constant 0 : i32
    %c0_i32_0 = arith.constant 0 : i32
    return %arg0, %c0_i32 : i32, i32
  }
  func.func @transform_6(%arg0: i32) -> (i32, i32) {
    %c0_i32 = arith.constant 0 : i32
    %c0_i32_0 = arith.constant 0 : i32
    return %arg0, %c0_i32 : i32, i32
  }
  func.func @transform_7(%arg0: i32) -> (i32, i32) {
    %c0_i32 = arith.constant 0 : i32
    %c0_i32_0 = arith.constant 0 : i32
    return %arg0, %c0_i32 : i32, i32
  }
  func.func @transform_8(%arg0: i32) -> (i32, i32) {
    %c0_i32 = arith.constant 0 : i32
    %c0_i32_0 = arith.constant 0 : i32
    return %arg0, %c0_i32 : i32, i32
  }
}

</mosaic_0001>

<llo_original>
// kernel: tpu_custom_call.1
$region0: #{tpu_custom_call.1}
  #allocation0 [shape = 'u32[]', space=smem, size = 0x4, offset = 0x4, fixed_abs, tag = 'smem constant byte address 0x4 - core index']
  #allocation1 [shape = 'u32[72,128]{1,0:T(1,128)}', space=vmem, size = 0x9000, scoped, tag = 'internal scratch']
  %s0 = inlined_call_operand.hbm [shape: f32[8,128], index: 0, kind: input, shape index: {}]
  %s1 = inlined_call_operand.hbm [shape: f32[128,256], index: 1, kind: input, shape index: {}]
  %s2 = inlined_call_operand.hbm [shape: f32[1,256], index: 2, kind: input, shape index: {}]
  %s3 = inlined_call_operand.hbm [shape: f32[128,128], index: 3, kind: input, shape index: {}]
  %s4 = inlined_call_operand.vmem [shape: f32[1,128], index: 4, kind: input, shape index: {}]
  %s5 = inlined_call_operand.hbm [shape: f32[8,128], index: 5, kind: input, shape index: {}]
  %s6 = inlined_call_operand.hbm [shape: f32[8,128], index: 6, kind: output, shape index: {0}]
  %s7 = inlined_call_operand.hbm [shape: f32[8,128], index: 7, kind: output, shape index: {1}]
  %s8 = inlined_call_operand.hbm [shape: f32[8,128], index: 8, kind: output, shape index: {2}]
  %9 = xla_tuple %s6, %s7, %s8
  %s10 = sld [smem:[#allocation0]]
  $region70: #{tpu_custom_call.1} parent=0
    _
  %s12 = ssub.s32 1, %s10
  %s13 = scalar_select 0, %s12, %s10
  $region1: #{tpu_custom_call.1} parent=0
    #allocation2 [shape = 'u8[4096]{0}', space=vmem, size = 0x1000, scoped, tag = 'input window, operand 0, single buffered']
    #allocation3 [shape = 's32[1]{0}', space=sflag, size = 0x4, scoped, tag = 'scoped memory for tpu_custom_call.1']
    #allocation4 [shape = 's32[1]{0}', space=sflag, size = 0x4, scoped, tag = 'scoped memory for tpu_custom_call.1']
    #allocation5 [shape = 'u8[131072]{0}', space=vmem, size = 0x20000, scoped, tag = 'input window, operand 1, single buffered']
    #allocation6 [shape = 's32[1]{0}', space=sflag, size = 0x4, scoped, tag = 'scoped memory for tpu_custom_call.1']
    #allocation7 [shape = 'u8[1024]{0}', space=vmem, size = 0x400, scoped, tag = 'input window, operand 2, single buffered']
    #allocation8 [shape = 'u8[65536]{0}', space=vmem, size = 0x10000, scoped, tag = 'input window, operand 3, single buffered']
    #allocation9 [shape = 's32[1]{0}', space=sflag, size = 0x4, scoped, tag = 'scoped memory for tpu_custom_call.1']
    #allocation10 [shape = 'u8[4096]{0}', space=vmem, size = 0x1000, scoped, tag = 'input window, operand 5, single buffered']
    #allocation11 [shape = 'u8[4096]{0}', space=vmem, size = 0x1000, scoped, tag = 'output window, operand 0, single buffered']
    #allocation12 [shape = 'u8[4096]{0}', space=vmem, size = 0x1000, scoped, tag = 'output window, operand 1, single buffered']
    #allocation13 [shape = 's32[1]{0}', space=sflag, size = 0x4, scoped, tag = 'scoped memory for tpu_custom_call.1']
    #allocation14 [shape = 'u8[4096]{0}', space=vmem, size = 0x1000, scoped, tag = 'output window, operand 2, single buffered']
    %14 = vsyncpa [#allocation3], 0
    %15 = vsyncpa [#allocation6], 0
    %16 = vsyncpa [#allocation9], 0
    %17 = vsyncpa [#allocation4], 0
    %18 = vsyncpa [#allocation13], 0
    // Predicated region
    $region2: #{tpu_custom_call.1} parent=1 // pred_check
      _
    $region3: #{tpu_custom_call.1} parent=1 // pred_check_branch
      %20 = sbr.rel (0) target = $region5
    $region4: #{tpu_custom_call.1} parent=1 // pred_region
      %22 = vsyncadd [#allocation3], 0
      %s24 = sshll.u32 %s0, 4
      %s25 = int_to_ptr.hbm [resolvable:$true] %s24
      %s26 = sshll.u32 [#allocation2], 4
      %s27 = int_to_ptr.vmem [resolvable:$true] %s26
      %29 = dma.hbm_to_vmem [thread:$0]  %s25, 128, %s27, [#allocation3]
    $region5: #{tpu_custom_call.1} parent=1 // pred_fallthru
      _
    // Predicated region
    $region6: #{tpu_custom_call.1} parent=1 // pred_check
      _
    $region7: #{tpu_custom_call.1} parent=1 // pred_check_branch
      %31 = sbr.rel (0) target = $region9
    $region8: #{tpu_custom_call.1} parent=1 // pred_region
      %33 = vsyncadd [#allocation6], 0
      %s34 = sshll.u32 %s1, 4
      %s35 = int_to_ptr.hbm [resolvable:$true] %s34
      %s36 = sshll.u32 [#allocation5], 4
      %s37 = int_to_ptr.vmem [resolvable:$true] %s36
      %42 = dma.hbm_to_vmem [thread:$0]  %s35, 4096, %s37, [#allocation6], 256, 256, 16
    $region9: #{tpu_custom_call.1} parent=1 // pred_fallthru
      _
    // Predicated region
    $region10: #{tpu_custom_call.1} parent=1 // pred_check
      _
    $region11: #{tpu_custom_call.1} parent=1 // pred_check_branch
      %44 = sbr.rel (0) target = $region13
    $region12: #{tpu_custom_call.1} parent=1 // pred_region
      %46 = vsyncadd [#allocation6], 0
      %s48 = sshll.u32 %s2, 4
      %s49 = int_to_ptr.hbm [resolvable:$true] %s48
      %s50 = sshll.u32 [#allocation7], 4
      %s51 = int_to_ptr.vmem [resolvable:$true] %s50
      %53 = dma.hbm_to_vmem [thread:$0]  %s49, 32, %s51, [#allocation6]
    $region13: #{tpu_custom_call.1} parent=1 // pred_fallthru
      _
    // Predicated region
    $region14: #{tpu_custom_call.1} parent=1 // pred_check
      _
    $region15: #{tpu_custom_call.1} parent=1 // pred_check_branch
      %55 = sbr.rel (0) target = $region17
    $region16: #{tpu_custom_call.1} parent=1 // pred_region
      %57 = vsyncadd [#allocation9], 0
      %s58 = sshll.u32 %s3, 4
      %s59 = int_to_ptr.hbm [resolvable:$true] %s58
      %s60 = sshll.u32 [#allocation8], 4
      %s61 = int_to_ptr.vmem [resolvable:$true] %s60
      %66 = dma.hbm_to_vmem [thread:$0]  %s59, 2048, %s61, [#allocation9], 128, 128, 8
    $region17: #{tpu_custom_call.1} parent=1 // pred_fallthru
      _
    // Predicated region
    $region18: #{tpu_custom_call.1} parent=1 // pred_check
      _
    $region19: #{tpu_custom_call.1} parent=1 // pred_check_branch
      %68 = sbr.rel (0) target = $region21
    $region20: #{tpu_custom_call.1} parent=1 // pred_region
      _
    $region21: #{tpu_custom_call.1} parent=1 // pred_fallthru
      _
    // Predicated region
    $region22: #{tpu_custom_call.1} parent=1 // pred_check
      _
    $region23: #{tpu_custom_call.1} parent=1 // pred_check_branch
      %70 = sbr.rel (0) target = $region25
    $region24: #{tpu_custom_call.1} parent=1 // pred_region
      %72 = vsyncadd [#allocation9], 0
      %s74 = sshll.u32 %s5, 4
      %s75 = int_to_ptr.hbm [resolvable:$true] %s74
      %s76 = sshll.u32 [#allocation10], 4
      %s77 = int_to_ptr.vmem [resolvable:$true] %s76
      %79 = dma.hbm_to_vmem [thread:$0]  %s75, 128, %s77, [#allocation9]
    $region25: #{tpu_custom_call.1} parent=1 // pred_fallthru
      _
    // Predicated region
    $region26: #{tpu_custom_call.1} parent=1 // pred_check
      _
    $region27: #{tpu_custom_call.1} parent=1 // pred_check_branch
      %81 = sbr.rel (0) target = $region29
    $region28: #{tpu_custom_call.1} parent=1 // pred_region
      %83 = dma.done [#allocation3], 128
    $region29: #{tpu_custom_call.1} parent=1 // pred_fallthru
      _
    // Predicated region
    $region30: #{tpu_custom_call.1} parent=1 // pred_check
      _
    $region31: #{tpu_custom_call.1} parent=1 // pred_check_branch
      %85 = sbr.rel (0) target = $region33
    $region32: #{tpu_custom_call.1} parent=1 // pred_region
      %87 = dma.done [#allocation6], 4096
    $region33: #{tpu_custom_call.1} parent=1 // pred_fallthru
      _
    // Predicated region
    $region34: #{tpu_custom_call.1} parent=1 // pred_check
      _
    $region35: #{tpu_custom_call.1} parent=1 // pred_check_branch
      %89 = sbr.rel (0) target = $region37
    $region36: #{tpu_custom_call.1} parent=1 // pred_region
      %91 = dma.done [#allocation6], 32
    $region37: #{tpu_custom_call.1} parent=1 // pred_fallthru
      _
    // Predicated region
    $region38: #{tpu_custom_call.1} parent=1 // pred_check
      _
    $region39: #{tpu_custom_call.1} parent=1 // pred_check_branch
      %93 = sbr.rel (0) target = $region41
    $region40: #{tpu_custom_call.1} parent=1 // pred_region
      %95 = dma.done [#allocation9], 2048
    $region41: #{tpu_custom_call.1} parent=1 // pred_fallthru
      _
    // Predicated region
    $region42: #{tpu_custom_call.1} parent=1 // pred_check
      _
    $region43: #{tpu_custom_call.1} parent=1 // pred_check_branch
      %97 = sbr.rel (0) target = $region45
    $region44: #{tpu_custom_call.1} parent=1 // pred_region
      %99 = dma.done [#allocation9], 128
    $region45: #{tpu_custom_call.1} parent=1 // pred_fallthru
      _
    %v100 = vld [vmem:[#allocation2] sm:$0xff]
    %v101 = vld [vmem:[#allocation5] sm:$0xff]
    %v102 = vld [vmem:[#allocation5 + $0x8] sm:$0xff]
    %v103 = vld [vmem:[#allocation5 + $0x10] sm:$0xff]
    %v104 = vld [vmem:[#allocation5 + $0x18] sm:$0xff]
    %v105 = vld [vmem:[#allocation5 + $0x20] sm:$0xff]
    %v106 = vld [vmem:[#allocation5 + $0x28] sm:$0xff]
    %v107 = vld [vmem:[#allocation5 + $0x30] sm:$0xff]
    %v108 = vld [vmem:[#allocation5 + $0x38] sm:$0xff]
    %v109 = vld [vmem:[#allocation5 + $0x40] sm:$0xff]
    %v110 = vld [vmem:[#allocation5 + $0x48] sm:$0xff]
    %v111 = vld [vmem:[#allocation5 + $0x50] sm:$0xff]
    %v112 = vld [vmem:[#allocation5 + $0x58] sm:$0xff]
    %v113 = vld [vmem:[#allocation5 + $0x60] sm:$0xff]
    %v114 = vld [vmem:[#allocation5 + $0x68] sm:$0xff]
    %v115 = vld [vmem:[#allocation5 + $0x70] sm:$0xff]
    %v116 = vld [vmem:[#allocation5 + $0x78] sm:$0xff]
    %v117 = vld [vmem:[#allocation5 + $0x80] sm:$0xff]
    %v118 = vld [vmem:[#allocation5 + $0x88] sm:$0xff]
    %v119 = vld [vmem:[#allocation5 + $0x90] sm:$0xff]
    %v120 = vld [vmem:[#allocation5 + $0x98] sm:$0xff]
    %v121 = vld [vmem:[#allocation5 + $0xa0] sm:$0xff]
    %v122 = vld [vmem:[#allocation5 + $0xa8] sm:$0xff]
    %v123 = vld [vmem:[#allocation5 + $0xb0] sm:$0xff]
    %v124 = vld [vmem:[#allocation5 + $0xb8] sm:$0xff]
    %v125 = vld [vmem:[#allocation5 + $0xc0] sm:$0xff]
    %v126 = vld [vmem:[#allocation5 + $0xc8] sm:$0xff]
    %v127 = vld [vmem:[#allocation5 + $0xd0] sm:$0xff]
    %v128 = vld [vmem:[#allocation5 + $0xd8] sm:$0xff]
    %v129 = vld [vmem:[#allocation5 + $0xe0] sm:$0xff]
    %v130 = vld [vmem:[#allocation5 + $0xe8] sm:$0xff]
    %v131 = vld [vmem:[#allocation5 + $0xf0] sm:$0xff]
    %v132 = vld [vmem:[#allocation5 + $0xf8] sm:$0xff]
    %v133 = vld [vmem:[#allocation7] sm:$0x3]
    %v135 = vperm.slane %v133, 0
    %v136 = vperm.slane %v133, 1
    %139 = vmatpush.msra.mxu0 %v131
    %140 = vmatpush.msra.mxu0 %v129
    %141 = vmatpush.msra.mxu0 %v127
    %142 = vmatpush.msra.mxu0 %v125
    %143 = vmatpush.msra.mxu0 %v123
    %144 = vmatpush.msra.mxu0 %v121
    %145 = vmatpush.msra.mxu0 %v119
    %146 = vmatpush.msra.mxu0 %v117
    %147 = vmatpush.msra.mxu0 %v115
    %148 = vmatpush.msra.mxu0 %v113
    %149 = vmatpush.msra.mxu0 %v111
    %150 = vmatpush.msra.mxu0 %v109
    %151 = vmatpush.msra.mxu0 %v107
    %152 = vmatpush.msra.mxu0 %v105
    %153 = vmatpush.msra.mxu0 %v103
    %154 = vmatpush.msra.mxu0 %v101
    %155 = vmatmul.f32.gmra.mxu0 %v100
    %v156 = vpop.f32.mrf.mxu0
    %v157 = vadd.f32 %v135, %v156
    %158 = vdwg.mxu0
    %159 = vmatpush.msra.mxu0 %v132
    %160 = vmatpush.msra.mxu0 %v130
    %161 = vmatpush.msra.mxu0 %v128
    %162 = vmatpush.msra.mxu0 %v126
    %163 = vmatpush.msra.mxu0 %v124
    %164 = vmatpush.msra.mxu0 %v122
    %165 = vmatpush.msra.mxu0 %v120
    %166 = vmatpush.msra.mxu0 %v118
    %167 = vmatpush.msra.mxu0 %v116
    %168 = vmatpush.msra.mxu0 %v114
    %169 = vmatpush.msra.mxu0 %v112
    %170 = vmatpush.msra.mxu0 %v110
    %171 = vmatpush.msra.mxu0 %v108
    %172 = vmatpush.msra.mxu0 %v106
    %173 = vmatpush.msra.mxu0 %v104
    %174 = vmatpush.msra.mxu0 %v102
    %175 = vmatmul.f32.gmra.mxu0 %v100
    %v176 = vpop.f32.mrf.mxu0
    %v177 = vadd.f32 %v136, %v176
    %178 = vdwg.mxu0
    %v179 = vmul.f32 %v177, 0.5
    %v180 = vmul.f32 %v179, 1.442695
    %v181 = vpow.pop %v180
    %v182 = vld [vmem:[#allocation10] sm:$0xff]
    %v183 = vmul.f32 %v182, %v181
    %v184 = vadd.f32 %v183, %v157
    %v185 = vld [vmem:[#allocation8] sm:$0xff]
    %v186 = vld [vmem:[#allocation8 + $0x8] sm:$0xff]
    %v187 = vld [vmem:[#allocation8 + $0x10] sm:$0xff]
    %v188 = vld [vmem:[#allocation8 + $0x18] sm:$0xff]
    %v189 = vld [vmem:[#allocation8 + $0x20] sm:$0xff]
    %v190 = vld [vmem:[#allocation8 + $0x28] sm:$0xff]
    %v191 = vld [vmem:[#allocation8 + $0x30] sm:$0xff]
    %v192 = vld [vmem:[#allocation8 + $0x38] sm:$0xff]
    %v193 = vld [vmem:[#allocation8 + $0x40] sm:$0xff]
    %v194 = vld [vmem:[#allocation8 + $0x48] sm:$0xff]
    %v195 = vld [vmem:[#allocation8 + $0x50] sm:$0xff]
    %v196 = vld [vmem:[#allocation8 + $0x58] sm:$0xff]
    %v197 = vld [vmem:[#allocation8 + $0x60] sm:$0xff]
    %v198 = vld [vmem:[#allocation8 + $0x68] sm:$0xff]
    %v199 = vld [vmem:[#allocation8 + $0x70] sm:$0xff]
    %v200 = vld [vmem:[#allocation8 + $0x78] sm:$0xff]
    %v201 = vld [vmem:[%s4] sm:$0x1]
    %v203 = vperm.slane %v201, 0
    %205 = vmatpush.msra.mxu0 %v200
    %206 = vmatpush.msra.mxu0 %v199
    %207 = vmatpush.msra.mxu0 %v198
    %208 = vmatpush.msra.mxu0 %v197
    %209 = vmatpush.msra.mxu0 %v196
    %210 = vmatpush.msra.mxu0 %v195
    %211 = vmatpush.msra.mxu0 %v194
    %212 = vmatpush.msra.mxu0 %v193
    %213 = vmatpush.msra.mxu0 %v192
    %214 = vmatpush.msra.mxu0 %v191
    %215 = vmatpush.msra.mxu0 %v190
    %216 = vmatpush.msra.mxu0 %v189
    %217 = vmatpush.msra.mxu0 %v188
    %218 = vmatpush.msra.mxu0 %v187
    %219 = vmatpush.msra.mxu0 %v186
    %220 = vmatpush.msra.mxu0 %v185
    %221 = vmatmul.f32.gmra.mxu0 %v184
    %v222 = vpop.f32.mrf.mxu0
    %v223 = vadd.f32 %v203, %v222
    %224 = vdwg.mxu0
    %225 = vst [vmem:[#allocation11] sm:$0xff] %v223
    %226 = vst [vmem:[#allocation12] sm:$0xff] %v157
    %227 = vst [vmem:[#allocation14] sm:$0xff] %v177
    // Predicated region
    $region46: #{tpu_custom_call.1} parent=1 // pred_check
      _
    $region47: #{tpu_custom_call.1} parent=1 // pred_check_branch
      %229 = sbr.rel (0) target = $region49
    $region48: #{tpu_custom_call.1} parent=1 // pred_region
      %231 = vsyncadd [#allocation4], 0
      %s233 = sshll.u32 [#allocation11], 4
      %s234 = int_to_ptr.vmem [resolvable:$true] %s233
      %s235 = sshll.u32 %s6, 4
      %s236 = int_to_ptr.hbm [resolvable:$true] %s235
      %238 = dma.vmem_to_hbm [thread:$0]  %s234, 128, %s236, [#allocation4]
    $region49: #{tpu_custom_call.1} parent=1 // pred_fallthru
      _
    // Predicated region
    $region50: #{tpu_custom_call.1} parent=1 // pred_check
      _
    $region51: #{tpu_custom_call.1} parent=1 // pred_check_branch
      %240 = sbr.rel (0) target = $region53
    $region52: #{tpu_custom_call.1} parent=1 // pred_region
      %242 = vsyncadd [#allocation13], 0
      %s244 = sshll.u32 [#allocation12], 4
      %s245 = int_to_ptr.vmem [resolvable:$true] %s244
      %s246 = sshll.u32 %s7, 4
      %s247 = int_to_ptr.hbm [resolvable:$true] %s246
      %249 = dma.vmem_to_hbm [thread:$0]  %s245, 128, %s247, [#allocation13]
    $region53: #{tpu_custom_call.1} parent=1 // pred_fallthru
      _
    // Predicated region
    $region54: #{tpu_custom_call.1} parent=1 // pred_check
      _
    $region55: #{tpu_custom_call.1} parent=1 // pred_check_branch
      %251 = sbr.rel (0) target = $region57
    $region56: #{tpu_custom_call.1} parent=1 // pred_region
      %253 = vsyncadd [#allocation13], 0
      %s255 = sshll.u32 [#allocation14], 4
      %s256 = int_to_ptr.vmem [resolvable:$true] %s255
      %s257 = sshll.u32 %s8, 4
      %s258 = int_to_ptr.hbm [resolvable:$true] %s257
      %260 = dma.vmem_to_hbm [thread:$0]  %s256, 128, %s258, [#allocation13]
    $region57: #{tpu_custom_call.1} parent=1 // pred_fallthru
      _
    // Predicated region
    $region58: #{tpu_custom_call.1} parent=1 // pred_check
      _
    $region59: #{tpu_custom_call.1} parent=1 // pred_check_branch
      %262 = sbr.rel (0) target = $region61
    $region60: #{tpu_custom_call.1} parent=1 // pred_region
      %264 = dma.done [#allocation4], 128
    $region61: #{tpu_custom_call.1} parent=1 // pred_fallthru
      _
    // Predicated region
    $region62: #{tpu_custom_call.1} parent=1 // pred_check
      _
    $region63: #{tpu_custom_call.1} parent=1 // pred_check_branch
      %266 = sbr.rel (0) target = $region65
    $region64: #{tpu_custom_call.1} parent=1 // pred_region
      %268 = dma.done [#allocation13], 128
    $region65: #{tpu_custom_call.1} parent=1 // pred_fallthru
      _
    // Predicated region
    $region66: #{tpu_custom_call.1} parent=1 // pred_check
      _
    $region67: #{tpu_custom_call.1} parent=1 // pred_check_branch
      %270 = sbr.rel (0) target = $region69
    $region68: #{tpu_custom_call.1} parent=1 // pred_region
      %272 = dma.done [#allocation13], 128
    $region69: #{tpu_custom_call.1} parent=1 // pred_fallthru
      _
    %273 = vsyncpa [#allocation3], 1
    %274 = vsyncpa [#allocation6], 1
    %275 = vsyncpa [#allocation9], 1
    %276 = vsyncpa [#allocation4], 1
    %277 = vsyncpa [#allocation13], 1

</llo_original>
